<compile_context>
chip_gen: v7x
topology: tpu7x:2x2x1
jax: 0.10.0
libtpu: 0.0.40
codegen_flags: <defaults>
</compile_context>

<pallas_src>
import functools
import math

import jax
import jax.numpy as jnp
from jax import lax
from jax.experimental import pallas as pl
from jax.experimental.pallas import tpu as pltpu

L_MAX = 3                      # hardcoded polynomial expansion up to l = 3
N_SPH = (L_MAX + 1) ** 2       # 16 output channels
LANES = 128
CHUNK = 16                     # sublane rows per inner kernel step (2048 samples;
                               # a multiple of 16 keeps bf16 stores full-vreg)
GRAN = CHUNK * LANES           # sample granule all blocks are padded to (2048)

# --- real spherical-harmonic prefactors (sphericart convention, no C-S phase) ---
_C00 = 0.5 / math.sqrt(math.pi)                       # l=0
_C1 = math.sqrt(3.0 / (4.0 * math.pi))                # l=1
_C2M2 = 0.5 * math.sqrt(15.0 / math.pi)               # l=2
_C2M1 = 0.5 * math.sqrt(15.0 / math.pi)
_C20 = 0.25 * math.sqrt(5.0 / math.pi)
_C2P1 = 0.5 * math.sqrt(15.0 / math.pi)
_C2P2 = 0.25 * math.sqrt(15.0 / math.pi)
_C3M3 = 0.25 * math.sqrt(35.0 / (2.0 * math.pi))      # l=3
_C3M2 = 0.5 * math.sqrt(105.0 / math.pi)
_C3M1 = 0.25 * math.sqrt(21.0 / (2.0 * math.pi))
_C30 = 0.25 * math.sqrt(7.0 / math.pi)
_C3P1 = 0.25 * math.sqrt(21.0 / (2.0 * math.pi))
_C3P2 = 0.25 * math.sqrt(105.0 / math.pi)
_C3P3 = 0.25 * math.sqrt(35.0 / (2.0 * math.pi))


def _round_up(a, b):
    return ((a + b - 1) // b) * b


def _emit_channels(x, y, z, normalized, put):
    """Emit the 16 (l<=3) real solid/spherical harmonics via put(channel, value).

    Channels are emitted in order l = 0..3, m = -l..l.  With normalized=True
    each l-block is divided by r^l (implemented by pre-scaling the coordinates
    with 1/r); at exactly r == 0 the unnormalized value (0 for l > 0) is
    returned, which also makes zero-padded lanes harmless.
    """
    if normalized:
        r2 = x * x + y * y + z * z
        inv_r = lax.rsqrt(jnp.where(r2 > 0.0, r2, jnp.ones_like(r2)))
        x, y, z = x * inv_r, y * inv_r, z * inv_r

    x2, y2, z2 = x * x, y * y, z * z
    xy, xz, yz = x * y, x * z, y * z
    r2 = x2 + y2 + z2

    put(0, jnp.full_like(x, _C00))                     # l = 0
    put(1, _C1 * y)                                    # l = 1 (m = -1, 0, +1)
    put(2, _C1 * z)
    put(3, _C1 * x)
    put(4, _C2M2 * xy)                                 # l = 2
    put(5, _C2M1 * yz)
    put(6, _C20 * (3.0 * z2 - r2))
    put(7, _C2P1 * xz)
    put(8, _C2P2 * (x2 - y2))
    put(9, _C3M3 * y * (3.0 * x2 - y2))                # l = 3
    put(10, _C3M2 * xy * z)
    put(11, _C3M1 * y * (5.0 * z2 - r2))
    put(12, _C30 * z * (5.0 * z2 - 3.0 * r2))
    put(13, _C3P1 * x * (5.0 * z2 - r2))
    put(14, _C3P2 * z * (x2 - y2))
    put(15, _C3P3 * x * (x2 - 3.0 * y2))


def _sh_kernel(xyz_ref, out_ref, *, normalized):
    # xyz_ref : (3, r_tile, 128)   rows are x, y, z, dense over sublanes x lanes
    # out_ref : (16, r_tile, 128)  one dense (r_tile, 128) slab per SH channel
    n_chunks = xyz_ref.shape[1] // CHUNK

    def chunk_body(j, carry):
        # Small sublane chunk keeps every temporary in 1-2 vregs -> no spills.
        row0 = pl.multiple_of(j * CHUNK, CHUNK)
        sl = pl.ds(row0, CHUNK)
        x = xyz_ref[0, sl, :]
        y = xyz_ref[1, sl, :]
        z = xyz_ref[2, sl, :]

        def put(c, v):
            # store each channel immediately: unmasked full-vreg vst per chunk
            out_ref[c, sl, :] = v.astype(out_ref.dtype)

        _emit_channels(x, y, z, normalized, put)
        return carry

    lax.fori_loop(0, n_chunks, chunk_body, 0)


def _pick_tile_n(n):
    # Aim for >= ~8 grid steps on large inputs (megacore / v7x 2-TC sharding),
    # keep per-step DMA >= ~0.6 MB so the ~0.35 us step overhead stays small,
    # and cap at 32768 samples (~4.8 MiB double-buffered VMEM) so the kernel
    # fits v5e's 16 MiB default scoped-VMEM limit without extra flags.
    want = _round_up(max(1, -(-n // 8)), GRAN)
    return int(min(32768, max(8192, want)))


def spherical_harmonics(xyz, l_max=L_MAX, normalized=False, *, tile_n=None,
                        out_dtype=None, channel_major=False, min_pallas_n=4096):
    """Pallas equivalent of SHModule.forward.

    xyz: (N, 3) torch layout, or (3, N) pre-transposed (fast path: skips the
         wrapper transpose/pad glue entirely).
    Returns (N, (l_max+1)^2) by default (torch layout; costs one XLA relayout
    pass of the output), or ((l_max+1)^2, N) with channel_major=True (fast
    path, no extra pass).  out_dtype=bfloat16 halves output HBM traffic.
    Inputs smaller than `min_pallas_n` use a pure-jnp fallback (kernel launch
    and padding overheads dominate there).
    """
    assert l_max == L_MAX, "this kernel hardcodes l_max = 3"
    assert xyz.ndim == 2, "xyz must be (N, 3) or (3, N)"

    if xyz.shape[0] == 3 and xyz.shape[1] != 3:
        xyz_cm, n = xyz, xyz.shape[1]                   # already (3, N): no glue
    else:
        assert xyz.shape[1] == 3, "xyz must be (N, 3) or (3, N)"
        n = xyz.shape[0]
        xyz_cm = xyz.T                                  # one small (24 B/sample) pass

    out_dtype = jnp.dtype(xyz.dtype if out_dtype is None else out_dtype)

    # ---- small-N fallback: pure jnp, no pad / launch / relayout overhead ----
    if n < min_pallas_n:
        rows = []
        _emit_channels(xyz_cm[0], xyz_cm[1], xyz_cm[2], normalized,
                       lambda c, v: rows.append(v))
        out_cm = jnp.stack(rows).astype(out_dtype)      # (16, N)
        return out_cm if channel_major else out_cm.T

    # ---- tiling ----
    if tile_n is None:
        tile_n = _pick_tile_n(n)
    n_pad = _round_up(n, GRAN)
    if n_pad <= tile_n:
        tile_n = n_pad                                  # single grid step
    else:
        tile_n = _round_up(int(tile_n), GRAN)
        n_pad = _round_up(n, tile_n)
    r_tile = tile_n // LANES
    r_total = n_pad // LANES

    # Glue: (at most) one pad + free contiguous reshape to lane-dense blocks.
    if n_pad != n:
        xyz_cm = jnp.pad(xyz_cm, ((0, 0), (0, n_pad - n)))
    xyz_3d = xyz_cm.reshape(3, r_total, LANES)          # (3, R_total, 128)

    cost = pl.CostEstimate(
        flops=64 * n_pad,
        transcendentals=(n_pad if normalized else 0),
        bytes_accessed=n_pad * (3 * xyz_cm.dtype.itemsize
                                + N_SPH * out_dtype.itemsize))

    out_3d = pl.pallas_call(
        functools.partial(_sh_kernel, normalized=normalized),
        out_shape=jax.ShapeDtypeStruct((N_SPH, r_total, LANES), out_dtype),
        grid=(r_total // r_tile,),
        in_specs=[pl.BlockSpec((3, r_tile, LANES), lambda i: (0, i, 0))],
        out_specs=pl.BlockSpec((N_SPH, r_tile, LANES), lambda i: (0, i, 0)),
        compiler_params=pltpu.CompilerParams(dimension_semantics=("parallel",)),
        cost_estimate=cost,
    )(xyz_3d)

    out_cm = out_3d.reshape(N_SPH, n_pad)[:, :n]        # (16, N) channel-major
    if channel_major:
        return out_cm                                   # fast path: no extra pass
    # TODO(synk): torch layout (N, 16) costs one extra full-output relayout pass
    # in XLA; bandwidth-bound consumers should take channel_major=True instead.
    return out_cm.T


def _reference(xyz, normalized=False):
    """Pure-jnp reference using the same formulas (sanity check; not the actual
    sphericart.torch library)."""
    rows = []
    _emit_channels(xyz[:, 0], xyz[:, 1], xyz[:, 2], normalized,
                   lambda c, v: rows.append(v))
    return jnp.stack(rows, axis=-1)                     # (N, 16)


if __name__ == "__main__":
    key = jax.random.PRNGKey(0)
    k1, k2 = jax.random.split(key)

    # torch fixture: xyz = 6 * randn(100, 3)  (float64 in torch; float32 on TPU).
    xyz = 6.0 * jax.random.normal(k1, (100, 3), dtype=jnp.float32)
    sph = jax.block_until_ready(
        spherical_harmonics(xyz, l_max=3, normalized=False, min_pallas_n=0))
    assert sph.shape == (100, N_SPH), sph.shape
    ref = _reference(xyz, normalized=False)
    assert jnp.allclose(sph, ref, rtol=1e-5, atol=1e-4), "mismatch vs reference"

    # larger input: multi-step grid, padded tail, normalized path.
    xyz2 = 6.0 * jax.random.normal(k2, (5000, 3), dtype=jnp.float32)
    sph2 = jax.block_until_ready(
        spherical_harmonics(xyz2, l_max=3, normalized=True, tile_n=2048))
    assert sph2.shape == (5000, N_SPH), sph2.shape
    ref2 = _reference(xyz2, normalized=True)
    assert jnp.allclose(sph2, ref2, rtol=1e-5, atol=1e-5), "mismatch (normalized)"

    # fast paths: pre-transposed (3, N) input + channel-major output + bf16.
    sph3 = jax.block_until_ready(
        spherical_harmonics(xyz2.T, l_max=3, normalized=False,
                            channel_major=True, out_dtype=jnp.bfloat16))
    assert sph3.shape == (N_SPH, 5000), sph3.shape
    assert sph3.dtype == jnp.bfloat16
    assert bool(jnp.all(jnp.isfinite(sph3.astype(jnp.float32))))

    print("KERNEL_OK")
</pallas_src>

<mosaic_0001>
module attributes {stable_mosaic.version = 11 : i64} {
  func.func @_sh_kernel(%arg0: i32, %arg1: memref<3x16x128xf32, #tpu.memory_space<vmem>>, %arg2: memref<16x16x128xf32, #tpu.memory_space<vmem>>) attributes {dimension_semantics = [#tpu.dimension_semantics<parallel>], iteration_bounds = array<i64: 1>, scalar_prefetch = 0 : i64, scratch_operands = 0 : i64, tpu.core_type = #tpu.core_type<tc>, window_params = [{transform_indices = @transform_0, window_bounds = array<i64: 3, 16, 128>}, {transform_indices = @transform_1, window_bounds = array<i64: 16, 16, 128>}]} {
    %c0_i32 = arith.constant 0 : i32
    %c16_i32 = arith.constant 16 : i32
    %0 = arith.muli %c0_i32, %c16_i32 : i32
    %1 = tpu.assume_multiple %0, 16 : i32
    %c0 = arith.constant 0 : index
    %2 = arith.index_cast %1 : i32 to index
    %c0_0 = arith.constant 0 : index
    %3 = vector.load %arg1[%c0, %2, %c0_0] : memref<3x16x128xf32, #tpu.memory_space<vmem>>, vector<1x16x128xf32>
    %4 = vector.shape_cast %3 : vector<1x16x128xf32> to vector<16x128xf32>
    %c1 = arith.constant 1 : index
    %5 = arith.index_cast %1 : i32 to index
    %c0_1 = arith.constant 0 : index
    %6 = vector.load %arg1[%c1, %5, %c0_1] : memref<3x16x128xf32, #tpu.memory_space<vmem>>, vector<1x16x128xf32>
    %7 = vector.shape_cast %6 : vector<1x16x128xf32> to vector<16x128xf32>
    %c2 = arith.constant 2 : index
    %8 = arith.index_cast %1 : i32 to index
    %c0_2 = arith.constant 0 : index
    %9 = vector.load %arg1[%c2, %8, %c0_2] : memref<3x16x128xf32, #tpu.memory_space<vmem>>, vector<1x16x128xf32>
    %10 = vector.shape_cast %9 : vector<1x16x128xf32> to vector<16x128xf32>
    %11 = arith.mulf %4, %4 : vector<16x128xf32>
    %12 = arith.mulf %7, %7 : vector<16x128xf32>
    %13 = arith.mulf %10, %10 : vector<16x128xf32>
    %14 = arith.mulf %4, %7 : vector<16x128xf32>
    %15 = arith.mulf %4, %10 : vector<16x128xf32>
    %16 = arith.mulf %7, %10 : vector<16x128xf32>
    %17 = arith.addf %11, %12 : vector<16x128xf32>
    %18 = arith.addf %17, %13 : vector<16x128xf32>
    %cst = arith.constant 0.282094806 : f32
    %19 = vector.broadcast %cst : f32 to vector<16x128xf32>
    %c0_3 = arith.constant 0 : index
    %20 = arith.index_cast %1 : i32 to index
    %c0_4 = arith.constant 0 : index
    %21 = vector.load %arg2[%c0_3, %20, %c0_4] : memref<16x16x128xf32, #tpu.memory_space<vmem>>, vector<1x16x128xf32>
    %22 = vector.shape_cast %21 : vector<1x16x128xf32> to vector<16x128xf32>
    %23 = vector.shape_cast %19 : vector<16x128xf32> to vector<1x16x128xf32>
    tpu.vector_store %arg2[%c0_3, %20, %c0_4], %23 {strides = array<i32>} : memref<16x16x128xf32, #tpu.memory_space<vmem>>, vector<1x16x128xf32>,
    %cst_5 = arith.constant 0.488602519 : f32
    %24 = vector.broadcast %cst_5 : f32 to vector<16x128xf32>
    %25 = arith.mulf %24, %7 : vector<16x128xf32>
    %c1_6 = arith.constant 1 : index
    %26 = arith.index_cast %1 : i32 to index
    %c0_7 = arith.constant 0 : index
    %27 = vector.load %arg2[%c1_6, %26, %c0_7] : memref<16x16x128xf32, #tpu.memory_space<vmem>>, vector<1x16x128xf32>
    %28 = vector.shape_cast %27 : vector<1x16x128xf32> to vector<16x128xf32>
    %29 = vector.shape_cast %25 : vector<16x128xf32> to vector<1x16x128xf32>
    tpu.vector_store %arg2[%c1_6, %26, %c0_7], %29 {strides = array<i32>} : memref<16x16x128xf32, #tpu.memory_space<vmem>>, vector<1x16x128xf32>,
    %cst_8 = arith.constant 0.488602519 : f32
    %30 = vector.broadcast %cst_8 : f32 to vector<16x128xf32>
    %31 = arith.mulf %30, %10 : vector<16x128xf32>
    %c2_9 = arith.constant 2 : index
    %32 = arith.index_cast %1 : i32 to index
    %c0_10 = arith.constant 0 : index
    %33 = vector.load %arg2[%c2_9, %32, %c0_10] : memref<16x16x128xf32, #tpu.memory_space<vmem>>, vector<1x16x128xf32>
    %34 = vector.shape_cast %33 : vector<1x16x128xf32> to vector<16x128xf32>
    %35 = vector.shape_cast %31 : vector<16x128xf32> to vector<1x16x128xf32>
    tpu.vector_store %arg2[%c2_9, %32, %c0_10], %35 {strides = array<i32>} : memref<16x16x128xf32, #tpu.memory_space<vmem>>, vector<1x16x128xf32>,
    %cst_11 = arith.constant 0.488602519 : f32
    %36 = vector.broadcast %cst_11 : f32 to vector<16x128xf32>
    %37 = arith.mulf %36, %4 : vector<16x128xf32>
    %c3 = arith.constant 3 : index
    %38 = arith.index_cast %1 : i32 to index
    %c0_12 = arith.constant 0 : index
    %39 = vector.load %arg2[%c3, %38, %c0_12] : memref<16x16x128xf32, #tpu.memory_space<vmem>>, vector<1x16x128xf32>
    %40 = vector.shape_cast %39 : vector<1x16x128xf32> to vector<16x128xf32>
    %41 = vector.shape_cast %37 : vector<16x128xf32> to vector<1x16x128xf32>
    tpu.vector_store %arg2[%c3, %38, %c0_12], %41 {strides = array<i32>} : memref<16x16x128xf32, #tpu.memory_space<vmem>>, vector<1x16x128xf32>,
    %cst_13 = arith.constant 1.09254849 : f32
    %42 = vector.broadcast %cst_13 : f32 to vector<16x128xf32>
    %43 = arith.mulf %42, %14 : vector<16x128xf32>
    %c4 = arith.constant 4 : index
    %44 = arith.index_cast %1 : i32 to index
    %c0_14 = arith.constant 0 : index
    %45 = vector.load %arg2[%c4, %44, %c0_14] : memref<16x16x128xf32, #tpu.memory_space<vmem>>, vector<1x16x128xf32>
    %46 = vector.shape_cast %45 : vector<1x16x128xf32> to vector<16x128xf32>
    %47 = vector.shape_cast %43 : vector<16x128xf32> to vector<1x16x128xf32>
    tpu.vector_store %arg2[%c4, %44, %c0_14], %47 {strides = array<i32>} : memref<16x16x128xf32, #tpu.memory_space<vmem>>, vector<1x16x128xf32>,
    %cst_15 = arith.constant 1.09254849 : f32
    %48 = vector.broadcast %cst_15 : f32 to vector<16x128xf32>
    %49 = arith.mulf %48, %16 : vector<16x128xf32>
    %c5 = arith.constant 5 : index
    %50 = arith.index_cast %1 : i32 to index
    %c0_16 = arith.constant 0 : index
    %51 = vector.load %arg2[%c5, %50, %c0_16] : memref<16x16x128xf32, #tpu.memory_space<vmem>>, vector<1x16x128xf32>
    %52 = vector.shape_cast %51 : vector<1x16x128xf32> to vector<16x128xf32>
    %53 = vector.shape_cast %49 : vector<16x128xf32> to vector<1x16x128xf32>
    tpu.vector_store %arg2[%c5, %50, %c0_16], %53 {strides = array<i32>} : memref<16x16x128xf32, #tpu.memory_space<vmem>>, vector<1x16x128xf32>,
    %cst_17 = arith.constant 3.000000e+00 : f32
    %54 = vector.broadcast %cst_17 : f32 to vector<16x128xf32>
    %55 = arith.mulf %54, %13 : vector<16x128xf32>
    %56 = arith.subf %55, %18 : vector<16x128xf32>
    %cst_18 = arith.constant 0.31539157 : f32
    %57 = vector.broadcast %cst_18 : f32 to vector<16x128xf32>
    %58 = arith.mulf %57, %56 : vector<16x128xf32>
    %c6 = arith.constant 6 : index
    %59 = arith.index_cast %1 : i32 to index
    %c0_19 = arith.constant 0 : index
    %60 = vector.load %arg2[%c6, %59, %c0_19] : memref<16x16x128xf32, #tpu.memory_space<vmem>>, vector<1x16x128xf32>
    %61 = vector.shape_cast %60 : vector<1x16x128xf32> to vector<16x128xf32>
    %62 = vector.shape_cast %58 : vector<16x128xf32> to vector<1x16x128xf32>
    tpu.vector_store %arg2[%c6, %59, %c0_19], %62 {strides = array<i32>} : memref<16x16x128xf32, #tpu.memory_space<vmem>>, vector<1x16x128xf32>,
    %cst_20 = arith.constant 1.09254849 : f32
    %63 = vector.broadcast %cst_20 : f32 to vector<16x128xf32>
    %64 = arith.mulf %63, %15 : vector<16x128xf32>
    %c7 = arith.constant 7 : index
    %65 = arith.index_cast %1 : i32 to index
    %c0_21 = arith.constant 0 : index
    %66 = vector.load %arg2[%c7, %65, %c0_21] : memref<16x16x128xf32, #tpu.memory_space<vmem>>, vector<1x16x128xf32>
    %67 = vector.shape_cast %66 : vector<1x16x128xf32> to vector<16x128xf32>
    %68 = vector.shape_cast %64 : vector<16x128xf32> to vector<1x16x128xf32>
    tpu.vector_store %arg2[%c7, %65, %c0_21], %68 {strides = array<i32>} : memref<16x16x128xf32, #tpu.memory_space<vmem>>, vector<1x16x128xf32>,
    %69 = arith.subf %11, %12 : vector<16x128xf32>
    %cst_22 = arith.constant 0.546274245 : f32
    %70 = vector.broadcast %cst_22 : f32 to vector<16x128xf32>
    %71 = arith.mulf %70, %69 : vector<16x128xf32>
    %c8 = arith.constant 8 : index
    %72 = arith.index_cast %1 : i32 to index
    %c0_23 = arith.constant 0 : index
    %73 = vector.load %arg2[%c8, %72, %c0_23] : memref<16x16x128xf32, #tpu.memory_space<vmem>>, vector<1x16x128xf32>
    %74 = vector.shape_cast %73 : vector<1x16x128xf32> to vector<16x128xf32>
    %75 = vector.shape_cast %71 : vector<16x128xf32> to vector<1x16x128xf32>
    tpu.vector_store %arg2[%c8, %72, %c0_23], %75 {strides = array<i32>} : memref<16x16x128xf32, #tpu.memory_space<vmem>>, vector<1x16x128xf32>,
    %cst_24 = arith.constant 0.590043604 : f32
    %76 = vector.broadcast %cst_24 : f32 to vector<16x128xf32>
    %77 = arith.mulf %76, %7 : vector<16x128xf32>
    %cst_25 = arith.constant 3.000000e+00 : f32
    %78 = vector.broadcast %cst_25 : f32 to vector<16x128xf32>
    %79 = arith.mulf %78, %11 : vector<16x128xf32>
    %80 = arith.subf %79, %12 : vector<16x128xf32>
    %81 = arith.mulf %77, %80 : vector<16x128xf32>
    %c9 = arith.constant 9 : index
    %82 = arith.index_cast %1 : i32 to index
    %c0_26 = arith.constant 0 : index
    %83 = vector.load %arg2[%c9, %82, %c0_26] : memref<16x16x128xf32, #tpu.memory_space<vmem>>, vector<1x16x128xf32>
    %84 = vector.shape_cast %83 : vector<1x16x128xf32> to vector<16x128xf32>
    %85 = vector.shape_cast %81 : vector<16x128xf32> to vector<1x16x128xf32>
    tpu.vector_store %arg2[%c9, %82, %c0_26], %85 {strides = array<i32>} : memref<16x16x128xf32, #tpu.memory_space<vmem>>, vector<1x16x128xf32>,
    %cst_27 = arith.constant 2.89061141 : f32
    %86 = vector.broadcast %cst_27 : f32 to vector<16x128xf32>
    %87 = arith.mulf %86, %14 : vector<16x128xf32>
    %88 = arith.mulf %87, %10 : vector<16x128xf32>
    %c10 = arith.constant 10 : index
    %89 = arith.index_cast %1 : i32 to index
    %c0_28 = arith.constant 0 : index
    %90 = vector.load %arg2[%c10, %89, %c0_28] : memref<16x16x128xf32, #tpu.memory_space<vmem>>, vector<1x16x128xf32>
    %91 = vector.shape_cast %90 : vector<1x16x128xf32> to vector<16x128xf32>
    %92 = vector.shape_cast %88 : vector<16x128xf32> to vector<1x16x128xf32>
    tpu.vector_store %arg2[%c10, %89, %c0_28], %92 {strides = array<i32>} : memref<16x16x128xf32, #tpu.memory_space<vmem>>, vector<1x16x128xf32>,
    %cst_29 = arith.constant 0.457045794 : f32
    %93 = vector.broadcast %cst_29 : f32 to vector<16x128xf32>
    %94 = arith.mulf %93, %7 : vector<16x128xf32>
    %cst_30 = arith.constant 5.000000e+00 : f32
    %95 = vector.broadcast %cst_30 : f32 to vector<16x128xf32>
    %96 = arith.mulf %95, %13 : vector<16x128xf32>
    %97 = arith.subf %96, %18 : vector<16x128xf32>
    %98 = arith.mulf %94, %97 : vector<16x128xf32>
    %c11 = arith.constant 11 : index
    %99 = arith.index_cast %1 : i32 to index
    %c0_31 = arith.constant 0 : index
    %100 = vector.load %arg2[%c11, %99, %c0_31] : memref<16x16x128xf32, #tpu.memory_space<vmem>>, vector<1x16x128xf32>
    %101 = vector.shape_cast %100 : vector<1x16x128xf32> to vector<16x128xf32>
    %102 = vector.shape_cast %98 : vector<16x128xf32> to vector<1x16x128xf32>
    tpu.vector_store %arg2[%c11, %99, %c0_31], %102 {strides = array<i32>} : memref<16x16x128xf32, #tpu.memory_space<vmem>>, vector<1x16x128xf32>,
    %cst_32 = arith.constant 0.373176336 : f32
    %103 = vector.broadcast %cst_32 : f32 to vector<16x128xf32>
    %104 = arith.mulf %103, %10 : vector<16x128xf32>
    %cst_33 = arith.constant 5.000000e+00 : f32
    %105 = vector.broadcast %cst_33 : f32 to vector<16x128xf32>
    %106 = arith.mulf %105, %13 : vector<16x128xf32>
    %cst_34 = arith.constant 3.000000e+00 : f32
    %107 = vector.broadcast %cst_34 : f32 to vector<16x128xf32>
    %108 = arith.mulf %107, %18 : vector<16x128xf32>
    %109 = arith.subf %106, %108 : vector<16x128xf32>
    %110 = arith.mulf %104, %109 : vector<16x128xf32>
    %c12 = arith.constant 12 : index
    %111 = arith.index_cast %1 : i32 to index
    %c0_35 = arith.constant 0 : index
    %112 = vector.load %arg2[%c12, %111, %c0_35] : memref<16x16x128xf32, #tpu.memory_space<vmem>>, vector<1x16x128xf32>
    %113 = vector.shape_cast %112 : vector<1x16x128xf32> to vector<16x128xf32>
    %114 = vector.shape_cast %110 : vector<16x128xf32> to vector<1x16x128xf32>
    tpu.vector_store %arg2[%c12, %111, %c0_35], %114 {strides = array<i32>} : memref<16x16x128xf32, #tpu.memory_space<vmem>>, vector<1x16x128xf32>,
    %cst_36 = arith.constant 0.457045794 : f32
    %115 = vector.broadcast %cst_36 : f32 to vector<16x128xf32>
    %116 = arith.mulf %115, %4 : vector<16x128xf32>
    %cst_37 = arith.constant 5.000000e+00 : f32
    %117 = vector.broadcast %cst_37 : f32 to vector<16x128xf32>
    %118 = arith.mulf %117, %13 : vector<16x128xf32>
    %119 = arith.subf %118, %18 : vector<16x128xf32>
    %120 = arith.mulf %116, %119 : vector<16x128xf32>
    %c13 = arith.constant 13 : index
    %121 = arith.index_cast %1 : i32 to index
    %c0_38 = arith.constant 0 : index
    %122 = vector.load %arg2[%c13, %121, %c0_38] : memref<16x16x128xf32, #tpu.memory_space<vmem>>, vector<1x16x128xf32>
    %123 = vector.shape_cast %122 : vector<1x16x128xf32> to vector<16x128xf32>
    %124 = vector.shape_cast %120 : vector<16x128xf32> to vector<1x16x128xf32>
    tpu.vector_store %arg2[%c13, %121, %c0_38], %124 {strides = array<i32>} : memref<16x16x128xf32, #tpu.memory_space<vmem>>, vector<1x16x128xf32>,
    %cst_39 = arith.constant 1.44530571 : f32
    %125 = vector.broadcast %cst_39 : f32 to vector<16x128xf32>
    %126 = arith.mulf %125, %10 : vector<16x128xf32>
    %127 = arith.subf %11, %12 : vector<16x128xf32>
    %128 = arith.mulf %126, %127 : vector<16x128xf32>
    %c14 = arith.constant 14 : index
    %129 = arith.index_cast %1 : i32 to index
    %c0_40 = arith.constant 0 : index
    %130 = vector.load %arg2[%c14, %129, %c0_40] : memref<16x16x128xf32, #tpu.memory_space<vmem>>, vector<1x16x128xf32>
    %131 = vector.shape_cast %130 : vector<1x16x128xf32> to vector<16x128xf32>
    %132 = vector.shape_cast %128 : vector<16x128xf32> to vector<1x16x128xf32>
    tpu.vector_store %arg2[%c14, %129, %c0_40], %132 {strides = array<i32>} : memref<16x16x128xf32, #tpu.memory_space<vmem>>, vector<1x16x128xf32>,
    %cst_41 = arith.constant 0.590043604 : f32
    %133 = vector.broadcast %cst_41 : f32 to vector<16x128xf32>
    %134 = arith.mulf %133, %4 : vector<16x128xf32>
    %cst_42 = arith.constant 3.000000e+00 : f32
    %135 = vector.broadcast %cst_42 : f32 to vector<16x128xf32>
    %136 = arith.mulf %135, %12 : vector<16x128xf32>
    %137 = arith.subf %11, %136 : vector<16x128xf32>
    %138 = arith.mulf %134, %137 : vector<16x128xf32>
    %c15 = arith.constant 15 : index
    %139 = arith.index_cast %1 : i32 to index
    %c0_43 = arith.constant 0 : index
    %140 = vector.load %arg2[%c15, %139, %c0_43] : memref<16x16x128xf32, #tpu.memory_space<vmem>>, vector<1x16x128xf32>
    %141 = vector.shape_cast %140 : vector<1x16x128xf32> to vector<16x128xf32>
    %142 = vector.shape_cast %138 : vector<16x128xf32> to vector<1x16x128xf32>
    tpu.vector_store %arg2[%c15, %139, %c0_43], %142 {strides = array<i32>} : memref<16x16x128xf32, #tpu.memory_space<vmem>>, vector<1x16x128xf32>,
    %c1_i32 = arith.constant 1 : i32
    return
  }
  func.func @transform_0(%arg0: i32) -> (i32, i32, i32) {
    %c0_i32 = arith.constant 0 : i32
    %c0_i32_0 = arith.constant 0 : i32
    %c0_i32_1 = arith.constant 0 : i32
    return %c0_i32, %arg0, %c0_i32_0 : i32, i32, i32
  }
  func.func @transform_1(%arg0: i32) -> (i32, i32, i32) {
    %c0_i32 = arith.constant 0 : i32
    %c0_i32_0 = arith.constant 0 : i32
    %c0_i32_1 = arith.constant 0 : i32
    return %c0_i32, %arg0, %c0_i32_0 : i32, i32, i32
  }
}

</mosaic_0001>

<llo_original>
// kernel: tpu_custom_call.1
$region0: #{tpu_custom_call.1}
  #allocation0 [shape = 'u32[]', space=smem, size = 0x4, offset = 0x4, fixed_abs, tag = 'smem constant byte address 0x4 - core index']
  #allocation1 [shape = 'u32[144,128]{1,0:T(1,128)}', space=vmem, size = 0x12000, scoped, tag = 'internal scratch']
  %s0 = inlined_call_operand.hbm [shape: f32[3,16,128], index: 0, kind: input, shape index: {}]
  %s1 = inlined_call_operand.hbm [shape: f32[16,16,128], index: 1, kind: output, shape index: {}]
  %s2 = sld [smem:[#allocation0]]
  $region18: #{tpu_custom_call.1} parent=0
    _
  %s4 = ssub.s32 1, %s2
  %s5 = scalar_select 0, %s4, %s2
  $region1: #{tpu_custom_call.1} parent=0
    #allocation2 [shape = 'u8[24576]{0}', space=vmem, size = 0x6000, scoped, tag = 'input window, operand 0, single buffered']
    #allocation3 [shape = 's32[1]{0}', space=sflag, size = 0x4, scoped, tag = 'scoped memory for tpu_custom_call.1']
    #allocation4 [shape = 's32[1]{0}', space=sflag, size = 0x4, scoped, tag = 'scoped memory for tpu_custom_call.1']
    #allocation5 [shape = 'u8[131072]{0}', space=vmem, size = 0x20000, scoped, tag = 'output window, operand 0, single buffered']
    %6 = vsyncpa [#allocation3], 0
    %7 = vsyncpa [#allocation4], 0
    // Predicated region
    $region2: #{tpu_custom_call.1} parent=1 // pred_check
      _
    $region3: #{tpu_custom_call.1} parent=1 // pred_check_branch
      %9 = sbr.rel (0) target = $region5
    $region4: #{tpu_custom_call.1} parent=1 // pred_region
      %s11 = ssub.s32 768, 768
      %12 = vsyncadd [#allocation3], %s11
      %s13 = sshll.u32 [#allocation2], 4
      %s14 = int_to_ptr.vmem [resolvable:$true] %s13
      %19 = dma.hbm_to_vmem [thread:$0]  %s0, 768, %s14, [#allocation3], 128, 128, 8
    $region5: #{tpu_custom_call.1} parent=1 // pred_fallthru
      _
    // Predicated region
    $region6: #{tpu_custom_call.1} parent=1 // pred_check
      _
    $region7: #{tpu_custom_call.1} parent=1 // pred_check_branch
      %21 = sbr.rel (0) target = $region9
    $region8: #{tpu_custom_call.1} parent=1 // pred_region
      %22 = dma.done [#allocation3], 768
    $region9: #{tpu_custom_call.1} parent=1 // pred_fallthru
      _
    %v23 = vld [vmem:[#allocation2] sm:$0xff]
    %v24 = vld [vmem:[#allocation2 + $0x8] sm:$0xff]
    %s25 = sadd.s32 0, 16
    %s26 = scalar_lea.vmem [#allocation2], %s25
    %v27 = vld [vmem:[%s26] sm:$0xff]
    %v28 = vld [vmem:[%s26 + $0x8] sm:$0xff]
    %s29 = sadd.s32 0, 32
    %s30 = scalar_lea.vmem [#allocation2], %s29
    %v31 = vld [vmem:[%s30] sm:$0xff]
    %v32 = vld [vmem:[%s30 + $0x8] sm:$0xff]
    %v33 = vmul.f32 %v23, %v23
    %v34 = vmul.f32 %v24, %v24
    %v35 = vmul.f32 %v27, %v27
    %v36 = vmul.f32 %v28, %v28
    %v37 = vmul.f32 %v31, %v31
    %v38 = vmul.f32 %v32, %v32
    %v39 = vmul.f32 %v23, %v27
    %v40 = vmul.f32 %v24, %v28
    %v41 = vmul.f32 %v23, %v31
    %v42 = vmul.f32 %v24, %v32
    %v43 = vmul.f32 %v27, %v31
    %v44 = vmul.f32 %v28, %v32
    %v45 = vadd.f32 %v33, %v35
    %v46 = vadd.f32 %v34, %v36
    %v47 = vadd.f32 %v45, %v37
    %v48 = vadd.f32 %v46, %v38
    %49 = vst [vmem:[#allocation5] sm:$0xff] 0.2820948
    %50 = vst [vmem:[#allocation5 + $0x8] sm:$0xff] 0.2820948
    %v51 = vmul.f32 %v27, 0.48860252
    %v52 = vmul.f32 %v28, 0.48860252
    %s53 = scalar_lea.vmem [#allocation5], %s25
    %54 = vst [vmem:[%s53] sm:$0xff] %v51
    %55 = vst [vmem:[%s53 + $0x8] sm:$0xff] %v52
    %v56 = vmul.f32 %v31, 0.48860252
    %v57 = vmul.f32 %v32, 0.48860252
    %s58 = scalar_lea.vmem [#allocation5], %s29
    %59 = vst [vmem:[%s58] sm:$0xff] %v56
    %60 = vst [vmem:[%s58 + $0x8] sm:$0xff] %v57
    %v61 = vmul.f32 %v23, 0.48860252
    %v62 = vmul.f32 %v24, 0.48860252
    %s63 = sadd.s32 0, 48
    %s64 = scalar_lea.vmem [#allocation5], %s63
    %65 = vst [vmem:[%s64] sm:$0xff] %v61
    %66 = vst [vmem:[%s64 + $0x8] sm:$0xff] %v62
    %v67 = vmul.f32 %v39, 1.0925485
    %v68 = vmul.f32 %v40, 1.0925485
    %s69 = sadd.s32 0, 64
    %s70 = scalar_lea.vmem [#allocation5], %s69
    %71 = vst [vmem:[%s70] sm:$0xff] %v67
    %72 = vst [vmem:[%s70 + $0x8] sm:$0xff] %v68
    %v73 = vmul.f32 %v43, 1.0925485
    %v74 = vmul.f32 %v44, 1.0925485
    %s75 = sadd.s32 0, 80
    %s76 = scalar_lea.vmem [#allocation5], %s75
    %77 = vst [vmem:[%s76] sm:$0xff] %v73
    %78 = vst [vmem:[%s76 + $0x8] sm:$0xff] %v74
    %v79 = vmul.f32 %v37, 3.0
    %v80 = vmul.f32 %v38, 3.0
    %v81 = vsub.f32 %v79, %v47
    %v82 = vsub.f32 %v80, %v48
    %v83 = vmul.f32 %v81, 0.31539157
    %v84 = vmul.f32 %v82, 0.31539157
    %s85 = sadd.s32 0, 96
    %s86 = scalar_lea.vmem [#allocation5], %s85
    %87 = vst [vmem:[%s86] sm:$0xff] %v83
    %88 = vst [vmem:[%s86 + $0x8] sm:$0xff] %v84
    %v89 = vmul.f32 %v41, 1.0925485
    %v90 = vmul.f32 %v42, 1.0925485
    %s91 = sadd.s32 0, 112
    %s92 = scalar_lea.vmem [#allocation5], %s91
    %93 = vst [vmem:[%s92] sm:$0xff] %v89
    %94 = vst [vmem:[%s92 + $0x8] sm:$0xff] %v90
    %v95 = vsub.f32 %v33, %v35
    %v96 = vsub.f32 %v34, %v36
    %v97 = vmul.f32 %v95, 0.54627424
    %v98 = vmul.f32 %v96, 0.54627424
    %s99 = sadd.s32 0, 128
    %s100 = scalar_lea.vmem [#allocation5], %s99
    %101 = vst [vmem:[%s100] sm:$0xff] %v97
    %102 = vst [vmem:[%s100 + $0x8] sm:$0xff] %v98
    %v103 = vmul.f32 %v27, 0.5900436
    %v104 = vmul.f32 %v28, 0.5900436
    %v105 = vmul.f32 %v33, 3.0
    %v106 = vmul.f32 %v34, 3.0
    %v107 = vsub.f32 %v105, %v35
    %v108 = vsub.f32 %v106, %v36
    %v109 = vmul.f32 %v103, %v107
    %v110 = vmul.f32 %v104, %v108
    %s111 = sadd.s32 0, 144
    %s112 = scalar_lea.vmem [#allocation5], %s111
    %113 = vst [vmem:[%s112] sm:$0xff] %v109
    %114 = vst [vmem:[%s112 + $0x8] sm:$0xff] %v110
    %v115 = vmul.f32 %v39, 2.8906114
    %v116 = vmul.f32 %v40, 2.8906114
    %v117 = vmul.f32 %v115, %v31
    %v118 = vmul.f32 %v116, %v32
    %s119 = sadd.s32 0, 160
    %s120 = scalar_lea.vmem [#allocation5], %s119
    %121 = vst [vmem:[%s120] sm:$0xff] %v117
    %122 = vst [vmem:[%s120 + $0x8] sm:$0xff] %v118
    %v123 = vmul.f32 %v27, 0.4570458
    %v124 = vmul.f32 %v28, 0.4570458
    %v125 = vmul.f32 %v37, 5.0
    %v126 = vmul.f32 %v38, 5.0
    %v127 = vsub.f32 %v125, %v47
    %v128 = vsub.f32 %v126, %v48
    %v129 = vmul.f32 %v123, %v127
    %v130 = vmul.f32 %v124, %v128
    %s131 = sadd.s32 0, 176
    %s132 = scalar_lea.vmem [#allocation5], %s131
    %133 = vst [vmem:[%s132] sm:$0xff] %v129
    %134 = vst [vmem:[%s132 + $0x8] sm:$0xff] %v130
    %v135 = vmul.f32 %v31, 0.37317634
    %v136 = vmul.f32 %v32, 0.37317634
    %v137 = vmul.f32 %v47, 3.0
    %v138 = vmul.f32 %v48, 3.0
    %v139 = vsub.f32 %v125, %v137
    %v140 = vsub.f32 %v126, %v138
    %v141 = vmul.f32 %v135, %v139
    %v142 = vmul.f32 %v136, %v140
    %s143 = sadd.s32 0, 192
    %s144 = scalar_lea.vmem [#allocation5], %s143
    %145 = vst [vmem:[%s144] sm:$0xff] %v141
    %146 = vst [vmem:[%s144 + $0x8] sm:$0xff] %v142
    %v147 = vmul.f32 %v23, 0.4570458
    %v148 = vmul.f32 %v24, 0.4570458
    %v149 = vmul.f32 %v147, %v127
    %v150 = vmul.f32 %v148, %v128
    %s151 = sadd.s32 0, 208
    %s152 = scalar_lea.vmem [#allocation5], %s151
    %153 = vst [vmem:[%s152] sm:$0xff] %v149
    %154 = vst [vmem:[%s152 + $0x8] sm:$0xff] %v150
    %v155 = vmul.f32 %v31, 1.4453057
    %v156 = vmul.f32 %v32, 1.4453057
    %v157 = vmul.f32 %v155, %v95
    %v158 = vmul.f32 %v156, %v96
    %s159 = sadd.s32 0, 224
    %s160 = scalar_lea.vmem [#allocation5], %s159
    %161 = vst [vmem:[%s160] sm:$0xff] %v157
    %162 = vst [vmem:[%s160 + $0x8] sm:$0xff] %v158
    %v163 = vmul.f32 %v23, 0.5900436
    %v164 = vmul.f32 %v24, 0.5900436
    %v165 = vmul.f32 %v35, 3.0
    %v166 = vmul.f32 %v36, 3.0
    %v167 = vsub.f32 %v33, %v165
    %v168 = vsub.f32 %v34, %v166
    %v169 = vmul.f32 %v163, %v167
    %v170 = vmul.f32 %v164, %v168
    %s171 = sadd.s32 0, 240
    %s172 = scalar_lea.vmem [#allocation5], %s171
    %173 = vst [vmem:[%s172] sm:$0xff] %v169
    %174 = vst [vmem:[%s172 + $0x8] sm:$0xff] %v170
    // Predicated region
    $region10: #{tpu_custom_call.1} parent=1 // pred_check
      _
    $region11: #{tpu_custom_call.1} parent=1 // pred_check_branch
      %176 = sbr.rel (0) target = $region13
    $region12: #{tpu_custom_call.1} parent=1 // pred_region
      %s178 = ssub.s32 4096, 4096
      %179 = vsyncadd [#allocation4], %s178
      %s180 = sshll.u32 [#allocation5], 4
      %s181 = int_to_ptr.vmem [resolvable:$true] %s180
      %186 = dma.vmem_to_hbm [thread:$0]  %s181, 4096, %s1, [#allocation4], 128, 128, 8
    $region13: #{tpu_custom_call.1} parent=1 // pred_fallthru
      _
    // Predicated region
    $region14: #{tpu_custom_call.1} parent=1 // pred_check
      _
    $region15: #{tpu_custom_call.1} parent=1 // pred_check_branch
      %188 = sbr.rel (0) target = $region17
    $region16: #{tpu_custom_call.1} parent=1 // pred_region
      %189 = dma.done [#allocation4], 4096
    $region17: #{tpu_custom_call.1} parent=1 // pred_fallthru
      _
    %190 = vsyncpa [#allocation3], 1
    %191 = vsyncpa [#allocation4], 1

</llo_original>
